<compile_context>
chip_gen: v7x
topology: tpu7x:2x2x1
jax: 0.10.0
libtpu: 0.0.40
codegen_flags: <defaults>
</compile_context>

<pallas_src>
import functools

import numpy as np

import jax
import jax.numpy as jnp
from jax.experimental import pallas as pl
from jax.experimental.pallas import tpu as pltpu

_LANES = 128  # lanes per tile (fixed by hardware vreg layout)


def _round_up(x, m):
    return ((x + m - 1) // m) * m


def _max_tile_rows():
    """Per-generation row-tile cap (512 KiB / 1 MiB / 2 MiB f32 per buffer)."""
    try:
        kind = jax.devices()[0].device_kind.lower()
    except Exception:
        return 1024
    if "v7" in kind or "7x" in kind:
        return 4096
    if "v6" in kind:
        return 2048
    return 1024


def _gan_loss_kernel(*refs, mode, label, inv_n, tile_r, weighted, segments):
    """Accumulate the (weighted) loss term over the 1-D 'arbitrary' grid.

    refs = (x_ref, [w_ref,] o_ref, acc_ref)
      x_ref   : (tile_r, 128) tile of the flattened predictions.
      w_ref   : (tile_r, 1) f32 per-row weight (only when weighted=True).
      o_ref   : (1, 1) f32 scalar loss (written on the last grid step).
      acc_ref : (8, 128) f32 VMEM accumulator scratch.

    Static variants:
      segments is not None -> exact per-element mask (soft-label fallback).
      weighted             -> per-row 1/count weights (multi-scale / ragged).
      otherwise            -> fast path: raw term fold, single 1/N at the end.
    """
    if weighted:
        x_ref, w_ref, o_ref, acc_ref = refs
    else:
        x_ref, o_ref, acc_ref = refs
        w_ref = None

    i = pl.program_id(0)

    @pl.when(i == 0)
    def _():
        acc_ref[...] = jnp.zeros_like(acc_ref)

    x = x_ref[...].astype(jnp.float32)

    if mode == "mse":
        if label == 0.0:
            term = x * x
        else:
            d = x - label
            term = d * d
    else:  # "bce": -(y*log(x) + (1-y)*log(1-x)), logs clamped like PyTorch
        if label == 1.0:
            term = -jnp.maximum(jnp.log(x), -100.0)
        elif label == 0.0:
            term = -jnp.maximum(jnp.log(1.0 - x), -100.0)
        else:
            term = -(label * jnp.maximum(jnp.log(x), -100.0)
                     + (1.0 - label) * jnp.maximum(jnp.log(1.0 - x), -100.0))

    if segments is not None:
        # Soft-label fallback: exact per-element segment weights.
        rows = (jax.lax.broadcasted_iota(jnp.int32, (tile_r, _LANES), 0)
                + i * tile_r)
        lanes = jax.lax.broadcasted_iota(jnp.int32, (tile_r, _LANES), 1)
        gidx = rows * _LANES + lanes
        w = jnp.zeros((tile_r, _LANES), jnp.float32)
        for start, end, inv_c in segments:
            in_seg = jnp.logical_and(gidx >= start, gidx < end)
            w = jnp.where(in_seg, jnp.float32(inv_c), w)
        # The select is load-bearing: it keeps NaN/-inf from pad/OOB lanes
        # out of the accumulator.
        contrib = jnp.where(w > 0.0, term * w, 0.0)
    elif weighted:
        w = w_ref[...]  # (tile_r, 1), broadcast along lanes
        contrib = jnp.where(w > 0.0, term * w, 0.0)
    else:
        contrib = term  # fully aligned fast path: weight applied once at end

    # Fold the (tile_r, 128) tile down to one vreg with pure VPU adds.
    acc_ref[...] += jnp.sum(contrib.reshape(tile_r // 8, 8, _LANES), axis=0)

    @pl.when(i == pl.num_programs(0) - 1)
    def _():
        col = jnp.sum(acc_ref[...], axis=1, keepdims=True)    # (8, 1)
        total = jnp.sum(col, axis=0, keepdims=True)           # (1, 1)
        if (segments is None) and (not weighted):
            total = total * inv_n
        o_ref[...] = total


def _launch(x2d, w_rows, *, tile_r, grid_n, mode, label, inv_n, segments):
    weighted = w_rows is not None
    kernel = functools.partial(
        _gan_loss_kernel, mode=mode, label=float(label), inv_n=inv_n,
        tile_r=tile_r, weighted=weighted, segments=segments)

    in_specs = [pl.BlockSpec((tile_r, _LANES), lambda i: (i, 0))]
    args = [x2d]
    if weighted:
        in_specs.append(pl.BlockSpec((tile_r, 1), lambda i: (i, 0)))
        args.append(w_rows)

    out = pl.pallas_call(
        kernel,
        out_shape=jax.ShapeDtypeStruct((1, 1), jnp.float32),
        grid_spec=pltpu.PrefetchScalarGridSpec(
            num_scalar_prefetch=0,
            grid=(grid_n,),
            in_specs=in_specs,
            out_specs=pl.BlockSpec((1, 1), lambda i: (0, 0)),
            scratch_shapes=[pltpu.VMEM((8, _LANES), jnp.float32)],
        ),
        compiler_params=pltpu.CompilerParams(
            dimension_semantics=("arbitrary",)),
    )(*args)
    return out[0, 0]


def _fused_gan_loss(preds, label, mode):
    """Fused loss over all scales: sum_s mean(loss(pred_s, label))."""
    parts = [jnp.asarray(p).reshape(-1) for p in preds]
    counts = [int(p.size) for p in parts]
    dtype = parts[0].dtype
    label = float(label)
    max_rows = _max_tile_rows()
    hard = label in (0.0, 1.0)

    # ---- Path 1: single scale with a lane-aligned flat size -> zero-copy.
    # No slab, no concat, no padding of the data; at most a tiny per-row
    # weight column masks the OOB rows of a partial last block.
    if len(parts) == 1 and counts[0] % _LANES == 0:
        n = counts[0]
        rows = n // _LANES
        x2d = parts[0].reshape(rows, _LANES)
        tile_r = min(max_rows, _round_up(rows, 8))
        grid_n = pl.cdiv(rows, tile_r)
        if rows % tile_r == 0:
            return _launch(x2d, None, tile_r=tile_r, grid_n=grid_n, mode=mode,
                           label=label, inv_n=1.0 / n, segments=None)
        w = np.zeros((grid_n * tile_r, 1), np.float32)
        w[:rows] = 1.0 / n
        return _launch(x2d, jnp.asarray(w), tile_r=tile_r, grid_n=grid_n,
                       mode=mode, label=label, inv_n=None, segments=None)

    # ---- Path 2 (hard labels 0/1 -- the module defaults): label-valued pads
    # contribute exactly zero loss for both MSE and BCE, so only a per-row
    # 1/count weight is needed.  Typical multiscale discriminator maps are
    # tiny here, so the single concatenate that builds the slab is cheap.
    # TODO(synk): a large single scale whose flat size is NOT a multiple of
    # 128 still pays one slab copy; splitting off just the ragged tail would
    # need a second ragged input and is not worth it for real MUNIT shapes.
    if hard:
        rows_per_scale = [pl.cdiv(c, _LANES) for c in counts]
        rows_total = sum(rows_per_scale)
        rows_slab = max(_round_up(rows_total, 8), 8)
        tile_r = min(max_rows, rows_slab)
        grid_n = pl.cdiv(rows_slab, tile_r)

        pieces = []
        for part, c, r in zip(parts, counts, rows_per_scale):
            pieces.append(part)
            lane_pad = r * _LANES - c
            if lane_pad:
                pieces.append(jnp.full((lane_pad,), label, dtype))
        tail = (rows_slab - rows_total) * _LANES
        if tail:
            pieces.append(jnp.full((tail,), label, dtype))
        flat = pieces[0] if len(pieces) == 1 else jnp.concatenate(pieces)
        x2d = flat.reshape(rows_slab, _LANES)

        if len(parts) == 1 and rows_slab % tile_r == 0:
            # Single scale + aligned grid: pads are exactly zero-loss, so no
            # weights / masks are needed at all.
            return _launch(x2d, None, tile_r=tile_r, grid_n=grid_n, mode=mode,
                           label=label, inv_n=1.0 / counts[0], segments=None)

        w = np.zeros((grid_n * tile_r, 1), np.float32)
        off = 0
        for c, r in zip(counts, rows_per_scale):
            w[off:off + r] = 1.0 / c
            off += r
        return _launch(x2d, jnp.asarray(w), tile_r=tile_r, grid_n=grid_n,
                       mode=mode, label=label, inv_n=None, segments=None)

    # ---- Path 3 (soft labels, non-default): exact per-element segment mask.
    n_total = sum(counts)
    rows_slab = max(_round_up(pl.cdiv(n_total, _LANES), 8), 8)
    n_pad = rows_slab * _LANES
    tile_r = min(max_rows, rows_slab)
    grid_n = pl.cdiv(rows_slab, tile_r)
    pieces = list(parts)
    if n_pad > n_total:
        pad_val = 0.5 if mode == "bce" else 0.0   # finite term; masked anyway
        pieces.append(jnp.full((n_pad - n_total,), pad_val, dtype))
    flat = pieces[0] if len(pieces) == 1 else jnp.concatenate(pieces)
    x2d = flat.reshape(rows_slab, _LANES)
    segments = []
    off = 0
    for c in counts:
        segments.append((off, off + c, 1.0 / c))
        off += c
    return _launch(x2d, None, tile_r=tile_r, grid_n=grid_n, mode=mode,
                   label=label, inv_n=None, segments=tuple(segments))


class GANLossPallas:
    """JAX/Pallas port of GANLoss. No learnable parameters."""

    def __init__(self, use_lsgan=True, target_real_label=1.0,
                 target_gene_label=0.0):
        self.real_label = float(target_real_label)
        self.gene_label = float(target_gene_label)
        self.mode = "mse" if use_lsgan else "bce"

    def __call__(self, x, target_is_real):
        label = self.real_label if target_is_real else self.gene_label
        if isinstance(x[0], (list, tuple)):
            preds = [scale[-1] for scale in x]
        else:
            preds = [x[-1]]
        return _fused_gan_loss(tuple(preds), label, self.mode)


def _ref_loss(x, target_is_real, mode="mse", real_label=1.0, gene_label=0.0):
    """Pure-JAX reference (MSE / BCE with PyTorch-style log clamping)."""
    label = real_label if target_is_real else gene_label

    def per(pred):
        p = jnp.asarray(pred, jnp.float32)
        if mode == "mse":
            return jnp.mean((p - label) ** 2)
        lx = jnp.maximum(jnp.log(p), -100.0)
        l1x = jnp.maximum(jnp.log(1.0 - p), -100.0)
        return jnp.mean(-(label * lx + (1.0 - label) * l1x))

    if isinstance(x[0], (list, tuple)):
        return sum(per(s[-1]) for s in x)
    return per(x[-1])


if __name__ == "__main__":
    key = jax.random.PRNGKey(0)
    k1, k2, k3, k4, k5, k6 = jax.random.split(key, 6)

    # Multiscale-discriminator-like output: list of lists; only the last
    # entry of each inner list (the patch prediction map, NCHW) is used.
    scale0 = [
        jax.random.normal(k1, (2, 4, 16, 16), jnp.float32),   # intermediate
        jax.random.normal(k2, (2, 1, 15, 15), jnp.float32),   # prediction map
    ]
    scale1 = [
        jax.random.normal(k3, (2, 4, 8, 8), jnp.float32),
        jax.random.normal(k4, (2, 1, 7, 7), jnp.float32),
    ]
    x_multi = [scale0, scale1]

    # Single-discriminator output: flat list, last element is the prediction.
    x_single = [
        jax.random.normal(k5, (2, 4, 16, 16), jnp.float32),
        jax.random.normal(k1, (2, 1, 15, 15), jnp.float32),
    ]

    # Larger prediction map: exercises the zero-copy path (and, depending on
    # the chip generation's tile size, the no-mask fast path or the
    # row-weighted multi-step path).
    x_large = [jax.random.normal(k6, (2, 1, 160, 512), jnp.float32)]

    # BCE inputs must live in (0, 1): use sigmoid-activated predictions.
    x_bce = [
        [scale0[0], jax.nn.sigmoid(scale0[1])],
        [scale1[0], jax.nn.sigmoid(scale1[1])],
    ]

    lsgan_loss = GANLossPallas(use_lsgan=True)
    bce_loss = GANLossPallas(use_lsgan=False)
    soft_lsgan = GANLossPallas(use_lsgan=True, target_real_label=0.9)
    soft_bce = GANLossPallas(use_lsgan=False, target_real_label=0.9)

    loss_real = jax.block_until_ready(lsgan_loss(x_multi, True))
    loss_fake = jax.block_until_ready(lsgan_loss(x_multi, False))
    loss_single = jax.block_until_ready(lsgan_loss(x_single, True))
    loss_large = jax.block_until_ready(lsgan_loss(x_large, False))
    loss_bce_r = jax.block_until_ready(bce_loss(x_bce, True))
    loss_bce_f = jax.block_until_ready(bce_loss(x_bce, False))
    loss_soft_m = jax.block_until_ready(soft_lsgan(x_multi, True))
    loss_soft_b = jax.block_until_ready(soft_bce(x_bce, True))

    assert jnp.allclose(loss_real, _ref_loss(x_multi, True, "mse"),
                        rtol=1e-5, atol=1e-5)
    assert jnp.allclose(loss_fake, _ref_loss(x_multi, False, "mse"),
                        rtol=1e-5, atol=1e-5)
    assert jnp.allclose(loss_single, _ref_loss(x_single, True, "mse"),
                        rtol=1e-5, atol=1e-5)
    assert jnp.allclose(loss_large, _ref_loss(x_large, False, "mse"),
                        rtol=1e-5, atol=1e-5)
    assert jnp.allclose(loss_bce_r, _ref_loss(x_bce, True, "bce"),
                        rtol=1e-5, atol=1e-5)
    assert jnp.allclose(loss_bce_f, _ref_loss(x_bce, False, "bce"),
                        rtol=1e-5, atol=1e-5)
    assert jnp.allclose(loss_soft_m, _ref_loss(x_multi, True, "mse",
                                               real_label=0.9),
                        rtol=1e-5, atol=1e-5)
    assert jnp.allclose(loss_soft_b, _ref_loss(x_bce, True, "bce",
                                               real_label=0.9),
                        rtol=1e-5, atol=1e-5)

    print("KERNEL_OK")
</pallas_src>

<mosaic_0001>
module attributes {stable_mosaic.version = 11 : i64} {
  func.func @_gan_loss_kernel(%arg0: i32, %arg1: memref<8x128xf32, #tpu.memory_space<vmem>>, %arg2: memref<8x1xf32, #tpu.memory_space<vmem>>, %arg3: memref<1x1xf32, #tpu.memory_space<vmem>>, %arg4: memref<8x128xf32, #tpu.memory_space<vmem>>) attributes {dimension_semantics = [#tpu.dimension_semantics<arbitrary>], iteration_bounds = array<i64: 1>, scalar_prefetch = 0 : i64, scratch_operands = 1 : i64, tpu.core_type = #tpu.core_type<tc>, window_params = [{transform_indices = @transform_0, window_bounds = array<i64: 8, 128>}, {transform_indices = @transform_1, window_bounds = array<i64: 8, 1>}, {pipeline_mode = #tpu.pipeline_mode<synchronous>, transform_indices = @transform_2, window_bounds = array<i64: 1, 1>}]} {
    %c0_i32 = arith.constant 0 : i32
    %0 = arith.cmpi eq, %arg0, %c0_i32 : i32
    %1 = arith.extui %0 : i1 to i32
    %c0_i32_0 = arith.constant 0 : i32
    %2 = arith.cmpi ne, %1, %c0_i32_0 : i32
    scf.if %2 {
      %cst_13 = arith.constant 0.000000e+00 : f32
      %24 = vector.broadcast %cst_13 : f32 to vector<8x128xf32>
      %c0_14 = arith.constant 0 : index
      %c0_15 = arith.constant 0 : index
      %25 = vector.load %arg4[%c0_14, %c0_15] : memref<8x128xf32, #tpu.memory_space<vmem>>, vector<8x128xf32>
      tpu.vector_store %arg4[%c0_14, %c0_15], %24 {strides = array<i32>} : memref<8x128xf32, #tpu.memory_space<vmem>>, vector<8x128xf32>,
    } else {
    }
    %c0 = arith.constant 0 : index
    %c0_1 = arith.constant 0 : index
    %3 = vector.load %arg1[%c0, %c0_1] : memref<8x128xf32, #tpu.memory_space<vmem>>, vector<8x128xf32>
    %cst = arith.constant 1.000000e+00 : f32
    %4 = vector.broadcast %cst : f32 to vector<8x128xf32>
    %5 = arith.subf %3, %4 : vector<8x128xf32>
    %6 = arith.mulf %5, %5 : vector<8x128xf32>
    %c0_2 = arith.constant 0 : index
    %c0_3 = arith.constant 0 : index
    %7 = vector.load %arg2[%c0_2, %c0_3] : memref<8x1xf32, #tpu.memory_space<vmem>>, vector<8x1xf32>
    %cst_4 = arith.constant 0.000000e+00 : f32
    %8 = vector.broadcast %cst_4 : f32 to vector<8x1xf32>
    %9 = arith.cmpf ogt, %7, %8 : vector<8x1xf32>
    %10 = vector.broadcast %7 : vector<8x1xf32> to vector<8x128xf32>
    %11 = arith.mulf %6, %10 : vector<8x128xf32>
    %cst_5 = arith.constant 0.000000e+00 : f32
    %12 = vector.shape_cast %9 : vector<8x1xi1> to vector<8x1xi1>
    %13 = vector.broadcast %12 : vector<8x1xi1> to vector<8x128xi1>
    %14 = vector.broadcast %cst_5 : f32 to vector<8x128xf32>
    %15 = arith.select %13, %11, %14 : vector<8x128xi1>, vector<8x128xf32>
    %c0_6 = arith.constant 0 : index
    %c0_7 = arith.constant 0 : index
    %16 = vector.load %arg4[%c0_6, %c0_7] : memref<8x128xf32, #tpu.memory_space<vmem>>, vector<8x128xf32>
    %17 = vector.shape_cast %15 : vector<8x128xf32> to vector<1x8x128xf32>
    %cst_8 = arith.constant dense<0.000000e+00> : vector<8x128xf32>
    %18 = vector.multi_reduction <add>, %17, %cst_8 [0] : vector<1x8x128xf32> to vector<8x128xf32>
    %19 = arith.addf %16, %18 : vector<8x128xf32>
    %c0_9 = arith.constant 0 : index
    %c0_10 = arith.constant 0 : index
    %20 = vector.load %arg4[%c0_9, %c0_10] : memref<8x128xf32, #tpu.memory_space<vmem>>, vector<8x128xf32>
    tpu.vector_store %arg4[%c0_9, %c0_10], %19 {strides = array<i32>} : memref<8x128xf32, #tpu.memory_space<vmem>>, vector<8x128xf32>,
    %c0_i32_11 = arith.constant 0 : i32
    %21 = arith.cmpi eq, %arg0, %c0_i32_11 : i32
    %22 = arith.extui %21 : i1 to i32
    %c0_i32_12 = arith.constant 0 : i32
    %23 = arith.cmpi ne, %22, %c0_i32_12 : i32
    scf.if %23 {
      %c0_13 = arith.constant 0 : index
      %c0_14 = arith.constant 0 : index
      %24 = vector.load %arg4[%c0_13, %c0_14] : memref<8x128xf32, #tpu.memory_space<vmem>>, vector<8x128xf32>
      %cst_15 = arith.constant dense<0.000000e+00> : vector<8xf32>
      %25 = vector.multi_reduction <add>, %24, %cst_15 [1] : vector<8x128xf32> to vector<8xf32>
      %26 = vector.shape_cast %25 : vector<8xf32> to vector<8x1xf32>
      %cst_16 = arith.constant dense<0.000000e+00> : vector<1xf32>
      %27 = vector.multi_reduction <add>, %26, %cst_16 [0] : vector<8x1xf32> to vector<1xf32>
      %28 = vector.shape_cast %27 : vector<1xf32> to vector<1x1xf32>
      %c0_17 = arith.constant 0 : index
      %c0_18 = arith.constant 0 : index
      %29 = vector.load %arg3[%c0_17, %c0_18] : memref<1x1xf32, #tpu.memory_space<vmem>>, vector<1x1xf32>
      tpu.vector_store %arg3[%c0_17, %c0_18], %28 {strides = array<i32>} : memref<1x1xf32, #tpu.memory_space<vmem>>, vector<1x1xf32>,
    } else {
    }
    return
  }
  func.func @transform_0(%arg0: i32) -> (i32, i32) {
    %c0_i32 = arith.constant 0 : i32
    %c0_i32_0 = arith.constant 0 : i32
    return %arg0, %c0_i32 : i32, i32
  }
  func.func @transform_1(%arg0: i32) -> (i32, i32) {
    %c0_i32 = arith.constant 0 : i32
    %c0_i32_0 = arith.constant 0 : i32
    return %arg0, %c0_i32 : i32, i32
  }
  func.func @transform_2(%arg0: i32) -> (i32, i32) {
    %c0_i32 = arith.constant 0 : i32
    %c0_i32_0 = arith.constant 0 : i32
    %c0_i32_1 = arith.constant 0 : i32
    return %c0_i32, %c0_i32_0 : i32, i32
  }
}

</mosaic_0001>

<llo_original>
// kernel: tpu_custom_call.1
$region0: #{tpu_custom_call.1}
  #allocation0 [shape = 'u32[]', space=smem, size = 0x4, offset = 0x4, fixed_abs, tag = 'smem constant byte address 0x4 - core index']
  #allocation1 [shape = 'u32[144,128]{1,0:T(1,128)}', space=vmem, size = 0x12000, scoped, tag = 'internal scratch']
  #allocation2 [shape = 'f32[8,128]{1,0:T(8,128)}', space=vmem, size = 0x1000, scoped, tag = 'scratch operand']
  %s0 = inlined_call_operand.vmem [shape: f32[8,128], index: 0, kind: input, shape index: {}]
  %s1 = inlined_call_operand.vmem [shape: f32[8,1], index: 1, kind: input, shape index: {}]
  %s2 = inlined_call_operand.hbm [shape: f32[1,1], index: 2, kind: output, shape index: {}]
  %s3 = sld [smem:[#allocation0]]
  $region26: #{tpu_custom_call.1} parent=0
    _
  %s5 = ssub.s32 1, %s3
  %s6 = scalar_select 0, %s5, %s3
  $region1: #{tpu_custom_call.1} parent=0
    #allocation3 [shape = 'u8[512]{0}', space=vmem, size = 0x400, scoped, tag = 'output window, operand 0, single buffered']
    #allocation4 [shape = 's32[1]{0}', space=sflag, size = 0x4, scoped, tag = 'scoped memory for tpu_custom_call.1']
    %7 = vsyncpa [#allocation4], 0
    // Predicated region
    $region2: #{tpu_custom_call.1} parent=1 // pred_check
      _
    $region3: #{tpu_custom_call.1} parent=1 // pred_check_branch
      %9 = sbr.rel (0) target = $region5
    $region4: #{tpu_custom_call.1} parent=1 // pred_region
      _
    $region5: #{tpu_custom_call.1} parent=1 // pred_fallthru
      _
    // Predicated region
    $region6: #{tpu_custom_call.1} parent=1 // pred_check
      _
    $region7: #{tpu_custom_call.1} parent=1 // pred_check_branch
      %11 = sbr.rel (0) target = $region9
    $region8: #{tpu_custom_call.1} parent=1 // pred_region
      _
    $region9: #{tpu_custom_call.1} parent=1 // pred_fallthru
      _
    %p12 = scmp.eq.s32.totalorder 0, 0
    // Predicated region
    $region10: #{tpu_custom_call.1} parent=1 // pred_check
      %p13 = pneg %p12
    $region11: #{tpu_custom_call.1} parent=1 // pred_check_branch
      %15 = sbr.rel (%p13) target = $region13
    $region12: #{tpu_custom_call.1} parent=1 // pred_region
      %16 = vst [vmem:[#allocation2] sm:$0xff] 0.0
    $region13: #{tpu_custom_call.1} parent=1 // pred_fallthru
      _
    %v17 = vld [vmem:[%s0] sm:$0xff]
    %v18 = vsub.f32 %v17, 1.0
    %v19 = vmul.f32 %v18, %v18
    %v20 = vld [vmem:[%s1] sm:$0xff]
    %vm21 = vcmp.gt.f32.partialorder %v20, 0.0
    %23 = vset.pattern.permute.xlu0 0
    %24 = vperm.xlu0 %23, %v20
    %v25 = vpop.permute.xlu0 %24
    %v27 = vmul.f32 %v19, %v25
    %v28 = vsel %vm21, 1, 0
    %29 = vset.pattern.permute.xlu0 0
    %30 = vperm.xlu0 %29, %v28
    %v31 = vpop.permute.xlu0 %30
    %vm32 = vcmp.eq.s32.totalorder %v31, 1
    %v33 = vsel %vm32, %v27, 0.0
    %v34 = vld [vmem:[#allocation2] sm:$0xff]
    %v35 = vadd.f32 %v33, 0.0
    %v36 = vadd.f32 %v34, %v35
    %37 = vst [vmem:[#allocation2] sm:$0xff] %v36
    // Predicated region
    $region14: #{tpu_custom_call.1} parent=1 // pred_check
      %p38 = pneg %p12
    $region15: #{tpu_custom_call.1} parent=1 // pred_check_branch
      %40 = sbr.rel (%p38) target = $region17
    $region16: #{tpu_custom_call.1} parent=1 // pred_region
      %v41 = vld [vmem:[#allocation2] sm:$0xff]
      %42 = vadd.xlane.f32.xlu0 %v41
      %v43 = vpop.xlane.xlu0 %42
      %v44 = vrot.slane %v43, 4
      %v45 = vadd.f32 %v43, %v44
      %v46 = vrot.slane %v45, 2
      %v47 = vadd.f32 %v45, %v46
      %v48 = vrot.slane %v47, 1
      %v49 = vadd.f32 %v47, %v48
      %vm50 = vcmask 0
      %51 = vst.msk [vmem:[#allocation3] sm:$0x1] %vm50, %v49
    $region17: #{tpu_custom_call.1} parent=1 // pred_fallthru
      _
    // Predicated region
    $region18: #{tpu_custom_call.1} parent=1 // pred_check
      _
    $region19: #{tpu_custom_call.1} parent=1 // pred_check_branch
      %53 = sbr.rel (0) target = $region21
    $region20: #{tpu_custom_call.1} parent=1 // pred_region
      %s55 = ssub.s32 16, 16
      %56 = vsyncadd [#allocation4], %s55
      %s58 = sshll.u32 [#allocation3], 4
      %s59 = int_to_ptr.vmem [resolvable:$true] %s58
      %61 = dma.vmem_to_hbm [thread:$0]  %s59, 16, %s2, [#allocation4]
    $region21: #{tpu_custom_call.1} parent=1 // pred_fallthru
      _
    // Predicated region
    $region22: #{tpu_custom_call.1} parent=1 // pred_check
      _
    $region23: #{tpu_custom_call.1} parent=1 // pred_check_branch
      %63 = sbr.rel (0) target = $region25
    $region24: #{tpu_custom_call.1} parent=1 // pred_region
      %64 = dma.done [#allocation4], 16
    $region25: #{tpu_custom_call.1} parent=1 // pred_fallthru
      _
    %65 = vsyncpa [#allocation4], 1

</llo_original>
